<compile_context>
chip_gen: v7x
topology: tpu7x:2x2x1
jax: 0.10.0
libtpu: 0.0.40
codegen_flags: <defaults>
</compile_context>

<pallas_src>
import functools

import jax
import jax.numpy as jnp
from jax.experimental import pallas as pl
from jax.experimental.pallas import tpu as pltpu


def _round_up(n: int, m: int) -> int:
    return ((n + m - 1) // m) * m


def _predictor_kernel(x_ref, w_ref, b_ref, o_ref):
    # x_ref: (TB, H)  w_ref: (H, C)  b_ref: (1, C)  o_ref: (TB, C)
    logits = jnp.dot(x_ref[...], w_ref[...], preferred_element_type=jnp.float32)
    logits = logits + b_ref[...].astype(jnp.float32)   # broadcast (1,C) -> (TB,C)
    # Exact sigmoid via tanh: sigmoid(z) = 0.5 * (1 + tanh(z / 2)).
    # One EUP transcendental per element; VALU only does the mul/add/cast.
    pred = 0.5 * jnp.tanh(0.5 * logits) + 0.5
    o_ref[...] = pred.astype(o_ref.dtype)


@functools.partial(jax.jit, static_argnames=("block_b", "out_dtype"))
def predictor_forward(x, w, b, *, block_b: int = 512, out_dtype=None):
    """pred = sigmoid(x @ w + b), fused in a single Pallas kernel.

    x: (B, H)  activations (f32 or bf16; passed through untouched)
    w: (H, C)  weight (already transposed from PyTorch's (C, H))
    b: (C,)    bias
    """
    B, H = x.shape
    Hw, C = w.shape
    assert H == Hw, (H, Hw)
    if out_dtype is None:
        out_dtype = x.dtype

    # Sublane packing: bf16 packs 16 rows per vreg sublane group, f32 packs 8.
    sub = 16 if x.dtype == jnp.bfloat16 else 8

    # Balanced tile selection.  Force >= 2 tiles once the batch is non-trivial
    # so dimension_semantics=("parallel",) has work to split across v7x's two
    # TensorCores (neutral on single-TC v5e/v6e).
    n_tiles = pl.cdiv(B, block_b)
    if B >= 2 * sub:
        n_tiles = max(n_tiles, 2)
    n_tiles = max(n_tiles, 1)
    TB = _round_up(pl.cdiv(B, n_tiles), sub)
    if TB >= B:
        TB = B  # single tile covering the whole batch: full-dim block is legal.

    grid = (pl.cdiv(B, TB),)
    b2d = b.reshape(1, C)

    itemsize = jnp.dtype(x.dtype).itemsize
    cost = pl.CostEstimate(
        flops=2 * B * H * C,
        transcendentals=B * C,
        bytes_accessed=(B * H * itemsize
                        + H * C * jnp.dtype(w.dtype).itemsize
                        + C * jnp.dtype(b.dtype).itemsize
                        + B * C * jnp.dtype(out_dtype).itemsize),
    )

    out = pl.pallas_call(
        _predictor_kernel,
        out_shape=jax.ShapeDtypeStruct((B, C), out_dtype),
        grid=grid,
        in_specs=[
            pl.BlockSpec((TB, H), lambda i: (i, 0)),   # batch-tiled activations
            pl.BlockSpec((H, C), lambda i: (0, 0)),    # weight resident across grid
            pl.BlockSpec((1, C), lambda i: (0, 0)),    # bias resident across grid
        ],
        out_specs=pl.BlockSpec((TB, C), lambda i: (i, 0)),
        compiler_params=pltpu.CompilerParams(
            # Batch tiles are independent -> shard across TCs on v7x.
            dimension_semantics=("parallel",),
        ),
        cost_estimate=cost,
    )(x, w, b2d)

    return out


def reference_forward(x, w, b):
    logits = x.astype(jnp.float32) @ w.astype(jnp.float32) + b.astype(jnp.float32)[None, :]
    return jax.nn.sigmoid(logits)


if __name__ == "__main__":
    key = jax.random.PRNGKey(0)
    kx, kw, kb, kx2 = jax.random.split(key, 4)

    # Small shapes consistent with a KWS classifier head.
    B, H, C = 2, 32, 8
    x = jax.random.normal(kx, (B, H), dtype=jnp.float32)
    # Deterministic "nn.Linear(H, C)"-shaped params (stored pre-transposed).
    w = jax.random.normal(kw, (H, C), dtype=jnp.float32) * 0.1
    b = jax.random.normal(kb, (C,), dtype=jnp.float32) * 0.1

    pred = predictor_forward(x, w, b)
    pred = jax.block_until_ready(pred)
    ref = reference_forward(x, w, b)
    assert pred.shape == (B, C), pred.shape
    max_err = float(jnp.max(jnp.abs(pred - ref)))
    assert jnp.allclose(pred, ref, atol=1e-5, rtol=1e-5), f"max abs err {max_err}"

    # Second check: multi-tile / ragged grid path (B not a multiple of the tile).
    B2 = 40
    x2 = jax.random.normal(kx2, (B2, H), dtype=jnp.float32)
    pred2 = jax.block_until_ready(predictor_forward(x2, w, b))
    ref2 = reference_forward(x2, w, b)
    assert pred2.shape == (B2, C), pred2.shape
    max_err2 = float(jnp.max(jnp.abs(pred2 - ref2)))
    assert jnp.allclose(pred2, ref2, atol=1e-5, rtol=1e-5), f"max abs err {max_err2}"

    print("KERNEL_OK")
</pallas_src>

<mosaic_0001>
module attributes {stable_mosaic.version = 11 : i64} {
  func.func @_predictor_kernel(%arg0: i32, %arg1: memref<2x32xf32, #tpu.memory_space<vmem>>, %arg2: memref<32x8xf32, #tpu.memory_space<vmem>>, %arg3: memref<1x8xf32, #tpu.memory_space<vmem>>, %arg4: memref<2x8xf32, #tpu.memory_space<vmem>>) attributes {dimension_semantics = [#tpu.dimension_semantics<parallel>], iteration_bounds = array<i64: 1>, scalar_prefetch = 0 : i64, scratch_operands = 0 : i64, tpu.core_type = #tpu.core_type<tc>, window_params = [{transform_indices = @transform_0, window_bounds = array<i64: 2, 32>}, {pipeline_mode = #tpu.pipeline_mode<synchronous>, transform_indices = @transform_1, window_bounds = array<i64: 32, 8>}, {pipeline_mode = #tpu.pipeline_mode<synchronous>, transform_indices = @transform_2, window_bounds = array<i64: 1, 8>}, {transform_indices = @transform_3, window_bounds = array<i64: 2, 8>}]} {
    %c0 = arith.constant 0 : index
    %c0_0 = arith.constant 0 : index
    %0 = vector.load %arg1[%c0, %c0_0] : memref<2x32xf32, #tpu.memory_space<vmem>>, vector<2x32xf32>
    %c0_1 = arith.constant 0 : index
    %c0_2 = arith.constant 0 : index
    %1 = vector.load %arg2[%c0_1, %c0_2] : memref<32x8xf32, #tpu.memory_space<vmem>>, vector<32x8xf32>
    %cst = arith.constant dense<0.000000e+00> : vector<2x8xf32>
    %2 = tpu.matmul %0, %1, %cst {dimension_numbers = #tpu.dot_dimension_numbers<[1], [0], [0], [1], [0, 0, 1, 1], [], []>} : vector<2x32xf32>, vector<32x8xf32>, vector<2x8xf32> -> vector<2x8xf32>
    %c0_3 = arith.constant 0 : index
    %c0_4 = arith.constant 0 : index
    %3 = vector.load %arg3[%c0_3, %c0_4] : memref<1x8xf32, #tpu.memory_space<vmem>>, vector<1x8xf32>
    %4 = vector.broadcast %3 : vector<1x8xf32> to vector<2x8xf32>
    %5 = arith.addf %2, %4 : vector<2x8xf32>
    %cst_5 = arith.constant 5.000000e-01 : f32
    %6 = vector.broadcast %cst_5 : f32 to vector<2x8xf32>
    %7 = arith.mulf %6, %5 : vector<2x8xf32>
    %8 = math.tanh %7 : vector<2x8xf32>
    %cst_6 = arith.constant 5.000000e-01 : f32
    %9 = vector.broadcast %cst_6 : f32 to vector<2x8xf32>
    %10 = arith.mulf %9, %8 : vector<2x8xf32>
    %cst_7 = arith.constant 5.000000e-01 : f32
    %11 = vector.broadcast %cst_7 : f32 to vector<2x8xf32>
    %12 = arith.addf %10, %11 : vector<2x8xf32>
    %c0_8 = arith.constant 0 : index
    %c0_9 = arith.constant 0 : index
    %13 = vector.load %arg4[%c0_8, %c0_9] : memref<2x8xf32, #tpu.memory_space<vmem>>, vector<2x8xf32>
    tpu.vector_store %arg4[%c0_8, %c0_9], %12 {strides = array<i32>} : memref<2x8xf32, #tpu.memory_space<vmem>>, vector<2x8xf32>,
    return
  }
  func.func @transform_0(%arg0: i32) -> (i32, i32) {
    %c0_i32 = arith.constant 0 : i32
    %c0_i32_0 = arith.constant 0 : i32
    return %arg0, %c0_i32 : i32, i32
  }
  func.func @transform_1(%arg0: i32) -> (i32, i32) {
    %c0_i32 = arith.constant 0 : i32
    %c0_i32_0 = arith.constant 0 : i32
    %c0_i32_1 = arith.constant 0 : i32
    return %c0_i32, %c0_i32_0 : i32, i32
  }
  func.func @transform_2(%arg0: i32) -> (i32, i32) {
    %c0_i32 = arith.constant 0 : i32
    %c0_i32_0 = arith.constant 0 : i32
    %c0_i32_1 = arith.constant 0 : i32
    return %c0_i32, %c0_i32_0 : i32, i32
  }
  func.func @transform_3(%arg0: i32) -> (i32, i32) {
    %c0_i32 = arith.constant 0 : i32
    %c0_i32_0 = arith.constant 0 : i32
    return %arg0, %c0_i32 : i32, i32
  }
}

</mosaic_0001>

<llo_original>
// kernel: predictor_forward.1
$region0: #{predictor_forward.1}
  #allocation0 [shape = 'u32[]', space=smem, size = 0x4, offset = 0x4, fixed_abs, tag = 'smem constant byte address 0x4 - core index']
  #allocation1 [shape = 'u32[144,128]{1,0:T(1,128)}', space=vmem, size = 0x12000, scoped, tag = 'internal scratch']
  %s0 = inlined_call_operand.vmem [shape: f32[2,32], index: 0, kind: input, shape index: {}]
  %s1 = inlined_call_operand.vmem [shape: f32[32,8], index: 1, kind: input, shape index: {}]
  %s2 = inlined_call_operand.vmem [shape: f32[1,8], index: 2, kind: input, shape index: {}]
  %s3 = inlined_call_operand.hbm [shape: f32[2,8], index: 3, kind: output, shape index: {}]
  %s4 = sld [smem:[#allocation0]]
  $region22: #{predictor_forward.1} parent=0
    _
  %s6 = ssub.s32 1, %s4
  %s7 = scalar_select 0, %s6, %s4
  $region1: #{predictor_forward.1} parent=0
    #allocation2 [shape = 'u8[1024]{0}', space=vmem, size = 0x400, scoped, tag = 'output window, operand 0, single buffered']
    #allocation3 [shape = 's32[1]{0}', space=sflag, size = 0x4, scoped, tag = 'scoped memory for predictor_forward.1']
    %8 = vsyncpa [#allocation3], 0
    // Predicated region
    $region2: #{predictor_forward.1} parent=1 // pred_check
      _
    $region3: #{predictor_forward.1} parent=1 // pred_check_branch
      %10 = sbr.rel (0) target = $region5
    $region4: #{predictor_forward.1} parent=1 // pred_region
      _
    $region5: #{predictor_forward.1} parent=1 // pred_fallthru
      _
    // Predicated region
    $region6: #{predictor_forward.1} parent=1 // pred_check
      _
    $region7: #{predictor_forward.1} parent=1 // pred_check_branch
      %12 = sbr.rel (0) target = $region9
    $region8: #{predictor_forward.1} parent=1 // pred_region
      _
    $region9: #{predictor_forward.1} parent=1 // pred_fallthru
      _
    // Predicated region
    $region10: #{predictor_forward.1} parent=1 // pred_check
      _
    $region11: #{predictor_forward.1} parent=1 // pred_check_branch
      %14 = sbr.rel (0) target = $region13
    $region12: #{predictor_forward.1} parent=1 // pred_region
      _
    $region13: #{predictor_forward.1} parent=1 // pred_fallthru
      _
    %v15 = vld [vmem:[%s0] sm:$0x3]
    %v16 = vld [vmem:[%s1] sm:$0xff]
    %v17 = vld [vmem:[%s1 + $0x8] sm:$0xff]
    %v18 = vld [vmem:[%s1 + $0x10] sm:$0xff]
    %v19 = vld [vmem:[%s1 + $0x18] sm:$0xff]
    %v20 = vld [vmem:[%s2] sm:$0x1]
    %v22 = vlaneseq
    %v23 = vshrl.u32 %v22, 7
    %v24 = vsub.s32 0, %v23
    %v25 = vrot.slane %v20, %v24
    %vm27 = vcmask 261120
    %v29 = vsel %vm27, %v15, 0
    %31 = vmatprep.subr.mxu0 0.0
    %32 = vmatpush1.msra.mxu0 %v16
    %33 = vmatprep.subr.mxu0 0.0
    %34 = vmatpush1.msra.mxu0 %v17
    %35 = vmatprep.subr.mxu0 0.0
    %36 = vmatpush1.msra.mxu0 %v18
    %37 = vmatprep.subr.mxu0 0.0
    %38 = vmatpush1.msra.mxu0 %v19
    %39 = vmatprep.subr.mxu0 0.0
    %40 = vmatpush1.msra.mxu0 0.0
    %41 = vmatprep.subr.mxu0 0.0
    %42 = vmatpush1.msra.mxu0 0.0
    %43 = vmatprep.subr.mxu0 0.0
    %44 = vmatpush1.msra.mxu0 0.0
    %45 = vmatprep.subr.mxu0 0.0
    %46 = vmatpush1.msra.mxu0 0.0
    %47 = vmatprep.subr.mxu0 0.0
    %48 = vmatpush1.msra.mxu0 0.0
    %49 = vmatprep.subr.mxu0 0.0
    %50 = vmatpush1.msra.mxu0 0.0
    %51 = vmatprep.subr.mxu0 0.0
    %52 = vmatpush1.msra.mxu0 0.0
    %53 = vmatprep.subr.mxu0 0.0
    %54 = vmatpush1.msra.mxu0 0.0
    %55 = vmatprep.subr.mxu0 0.0
    %56 = vmatpush1.msra.mxu0 0.0
    %57 = vmatprep.subr.mxu0 0.0
    %58 = vmatpush1.msra.mxu0 0.0
    %59 = vmatprep.subr.mxu0 0.0
    %60 = vmatpush1.msra.mxu0 0.0
    %61 = vmatprep.subr.mxu0 0.0
    %62 = vmatpush1.msra.mxu0 0.0
    %63 = vmatprep.subr.mxu0 0.0
    %64 = vmatpush1.msra.mxu0 0.0
    %65 = vmatprep.subr.mxu0 0.0
    %66 = vmatpush1.msra.mxu0 0.0
    %67 = vmatprep.subr.mxu0 0.0
    %68 = vmatpush1.msra.mxu0 0.0
    %69 = vmatprep.subr.mxu0 0.0
    %70 = vmatpush1.msra.mxu0 0.0
    %71 = vmatprep.subr.mxu0 0.0
    %72 = vmatpush1.msra.mxu0 0.0
    %73 = vmatprep.subr.mxu0 0.0
    %74 = vmatpush1.msra.mxu0 0.0
    %75 = vmatprep.subr.mxu0 0.0
    %76 = vmatpush1.msra.mxu0 0.0
    %77 = vmatprep.subr.mxu0 0.0
    %78 = vmatpush1.msra.mxu0 0.0
    %79 = vmatprep.subr.mxu0 0.0
    %80 = vmatpush1.msra.mxu0 0.0
    %81 = vmatprep.subr.mxu0 0.0
    %82 = vmatpush1.msra.mxu0 0.0
    %83 = vmatprep.subr.mxu0 0.0
    %84 = vmatpush1.msra.mxu0 0.0
    %85 = vmatprep.subr.mxu0 0.0
    %86 = vmatpush1.msra.mxu0 0.0
    %87 = vmatprep.subr.mxu0 0.0
    %88 = vmatpush1.msra.mxu0 0.0
    %89 = vmatprep.subr.mxu0 0.0
    %90 = vmatpush1.msra.mxu0 0.0
    %91 = vmatprep.subr.mxu0 0.0
    %92 = vmatpush1.msra.mxu0 0.0
    %93 = vmatprep.subr.mxu0 0.0
    %94 = vmatpush1.msra.mxu0 0.0
    %95 = vmatprep.mubr.f32.mxu0 0.0
    %96 = vmatmul.mubr.f32.gmra.mrb[0].mxu0 %v29
    %v97 = vpop.f32.mrb[0].mxu0
    %v98 = vadd.f32 %v25, %v97
    %v99 = vpop.f32.mrb[0].mxu0
    %100 = vdwg.mxu0
    %v101 = vmul.f32 %v98, 0.5
    %v102 = vtanh.pop %v101
    %v103 = vmul.f32 %v102, 0.5
    %v104 = vadd.f32 %v103, 0.5
    %vm105 = vcmask 58368
    %106 = vst.msk [vmem:[#allocation2] sm:$0x3] %vm105, %v104
    // Predicated region
    $region14: #{predictor_forward.1} parent=1 // pred_check
      _
    $region15: #{predictor_forward.1} parent=1 // pred_check_branch
      %108 = sbr.rel (0) target = $region17
    $region16: #{predictor_forward.1} parent=1 // pred_region
      %s110 = ssub.s32 32, 32
      %111 = vsyncadd [#allocation3], %s110
      %s113 = sshll.u32 [#allocation2], 4
      %s114 = int_to_ptr.vmem [resolvable:$true] %s113
      %116 = dma.vmem_to_hbm [thread:$0]  %s114, 32, %s3, [#allocation3]
    $region17: #{predictor_forward.1} parent=1 // pred_fallthru
      _
    // Predicated region
    $region18: #{predictor_forward.1} parent=1 // pred_check
      _
    $region19: #{predictor_forward.1} parent=1 // pred_check_branch
      %118 = sbr.rel (0) target = $region21
    $region20: #{predictor_forward.1} parent=1 // pred_region
      %119 = dma.done [#allocation3], 32
    $region21: #{predictor_forward.1} parent=1 // pred_fallthru
      _
    %120 = vsyncpa [#allocation3], 1

</llo_original>
